<compile_context>
chip_gen: v6e
topology: v6e:2x2x1
jax: 0.10.0
libtpu: 0.0.40
codegen_flags: <defaults>
</compile_context>

<pallas_src>
import numpy as np
import jax
import jax.numpy as jnp
from jax.experimental import pallas as pl
from jax.experimental.pallas import tpu as pltpu


def _copy_kernel(x_ref, o_ref):
    # Identity copy of the current VMEM tile: one vld + one vst per vreg, so
    # no VLIW slot ever binds and HBM bandwidth stays the only roofline.
    o_ref[...] = x_ref[...]


# ~4 MiB tiles: on the measured copy-throughput plateau, fewer grid steps on
# v7x; 2(in)+2(out) double buffering = 16 MiB, covered by the explicit limit.
_TARGET_TILE_BYTES = 4 * 1024 * 1024
_VMEM_LIMIT_BYTES = 32 * 1024 * 1024       # < 64 MiB physical VMEM even on v7x
_LANE_W_MAX = 4096
_LANE_W_MIN = 512                          # below this, masked stores tank lane util
_FALLBACK_CHUNK_BYTES = 512 * 1024         # 1-D fallback chunk (layout-padding safe)


def _cdiv(a, b):
    return -(-a // b)


def _round_up(x, m):
    return _cdiv(x, m) * m


def _pick_lane_width(total):
    """Lane width W for retiling the flat buffer as (total // W, W).

    Prefers the largest multiple-of-128 divisor (lane-dense, unmasked vector
    stores).  Otherwise any divisor >= 512 (full-lane-extent block: only the
    final <128-lane vreg column is masked).  Returns None when no acceptable
    factorization exists; the caller then uses the 1-D chunked fallback.
    """
    hi = min(_LANE_W_MAX, total)
    for w in range(hi - hi % 128, 127, -128):
        if total % w == 0:
            return w
    for w in range(hi, _LANE_W_MIN - 1, -1):
        if total % w == 0:
            return w
    return None


def flatten_pallas(feat, dim=-1, materialize=True):
    """Equivalent of torch.flatten(feat, start_dim=dim).

    By default the flattened result is materialized via a Pallas identity-copy
    kernel.  Pass materialize=False for the zero-cost metadata-only path
    (torch.flatten itself returns a view for contiguous tensors).
    """
    nd = feat.ndim
    if nd == 0:
        return feat.reshape(1)            # torch.flatten(0-d) -> shape (1,)

    d = dim % nd
    out_shape = feat.shape[:d] + (int(np.prod(feat.shape[d:], dtype=np.int64)),)
    total = int(np.prod(feat.shape, dtype=np.int64))

    # Pure-metadata fast paths: no copy is semantically required.
    if out_shape == feat.shape:           # dim == ndim-1: flatten is the identity
        return feat
    if total == 0 or not materialize:
        return feat.reshape(out_shape)    # free row-major view in XLA

    itemsize = np.dtype(feat.dtype).itemsize
    sublane = {1: 32, 2: 16}.get(itemsize, 8)   # sublane packing per dtype

    # NOTE: if the caller can donate `feat`, input_output_aliases={0: 0} would
    # halve HBM *footprint* (not traffic) for this identity copy; left off
    # since donation is a caller-side decision.
    cost = pl.CostEstimate(flops=0, transcendentals=0,
                           bytes_accessed=2 * total * itemsize)
    cparams = pltpu.CompilerParams(
        dimension_semantics=("parallel",),      # megacore-shard blocks on v7x
        vmem_limit_bytes=_VMEM_LIMIT_BYTES,     # 4 x 4 MiB buffers fit on v5e too
    )

    w = _pick_lane_width(total)
    if w is not None:
        # ---- Main path: lane-dense 2-D retiling of the flat buffer. ----
        rows = total // w
        row_block = max(sublane,
                        (_TARGET_TILE_BYTES // (w * itemsize)) // sublane * sublane)
        if rows > sublane:
            # Guarantee >= 2 grid steps so both v7x TensorCores get work.
            row_block = min(row_block, _round_up(_cdiv(rows, 2), sublane))
        if row_block >= rows:
            row_block = rows                    # whole (small) array in one block
        grid_rows = _cdiv(rows, row_block)      # ragged last block masked by Pallas

        # Free row-major views (bitcast in XLA); the kernel does the only copy.
        x2 = feat.reshape(rows, w)
        y2 = pl.pallas_call(
            _copy_kernel,
            out_shape=jax.ShapeDtypeStruct((rows, w), feat.dtype),
            grid=(grid_rows,),
            in_specs=[pl.BlockSpec((row_block, w), lambda i: (i, 0))],
            out_specs=pl.BlockSpec((row_block, w), lambda i: (i, 0)),
            compiler_params=cparams,
            cost_estimate=cost,
        )(x2)
        return y2.reshape(out_shape)

    # ---- Fallback (pathological element counts, e.g. 4 * large_prime): ----
    # 1-D chunked copy over the flat buffer.  Chunks are multiples of 1024
    # elements (lane-dense); the ragged tail block is masked by Pallas.  Chunk
    # kept at 512 KiB so worst-case VMEM layout padding stays far under limit.
    chunk = max(1024, (_FALLBACK_CHUNK_BYTES // itemsize) // 1024 * 1024)
    chunk = min(chunk, _round_up(_cdiv(total, 2), 1024))   # >= 2 chunks when big
    if chunk >= total:
        chunk = total                     # single full-extent block (always legal)
    grid_chunks = _cdiv(total, chunk)

    x1 = feat.reshape(total)
    y1 = pl.pallas_call(
        _copy_kernel,
        out_shape=jax.ShapeDtypeStruct((total,), feat.dtype),
        grid=(grid_chunks,),
        in_specs=[pl.BlockSpec((chunk,), lambda i: (i,))],
        out_specs=pl.BlockSpec((chunk,), lambda i: (i,)),
        compiler_params=cparams,
        cost_estimate=cost,
    )(x1)
    return y1.reshape(out_shape)


if __name__ == "__main__":
    key = jax.random.PRNGKey(0)
    k0, k1, k2 = jax.random.split(key, 3)

    # Small NCHW feature map consistent with a conv backbone: batch=2, C=4, H=W=16.
    x = jax.random.normal(k0, (2, 4, 16, 16), dtype=jnp.float32)

    # Module default dim=-1: flatten of the last axis only -> identity fast path.
    y_default = jax.block_until_ready(flatten_pallas(x, dim=-1))
    assert y_default.shape == x.shape and y_default.dtype == x.dtype
    np.testing.assert_array_equal(np.asarray(y_default), np.asarray(x))

    # Typical SimCLR usage: flatten everything after the batch dim (kernel path).
    y1 = jax.block_until_ready(flatten_pallas(x, dim=1))
    assert y1.shape == (2, 4 * 16 * 16) and y1.dtype == x.dtype
    np.testing.assert_array_equal(np.asarray(y1), np.asarray(x).reshape(2, -1))

    # bf16 coverage (different sublane packing factor).
    xh = x.astype(jnp.bfloat16)
    yh = jax.block_until_ready(flatten_pallas(xh, dim=1))
    np.testing.assert_array_equal(np.asarray(yh), np.asarray(xh).reshape(2, -1))

    # Multi-step grid: ragged final row block + the >=2-block megacore clamp.
    xb = jax.random.normal(k1, (8, 16, 32, 129), dtype=jnp.float32)
    yb = jax.block_until_ready(flatten_pallas(xb, dim=1))
    np.testing.assert_array_equal(np.asarray(yb), np.asarray(xb).reshape(8, -1))

    # Element count with no acceptable 2-D factorization -> 1-D fallback path.
    xo = jax.random.normal(k2, (3, 5, 7), dtype=jnp.float32)
    yo = jax.block_until_ready(flatten_pallas(xo, dim=0))
    np.testing.assert_array_equal(np.asarray(yo), np.asarray(xo).reshape(-1))

    # Free metadata-only path (torch.flatten semantics: a view, no copy).
    ym = jax.block_until_ready(flatten_pallas(x, dim=1, materialize=False))
    np.testing.assert_array_equal(np.asarray(ym), np.asarray(x).reshape(2, -1))

    print("KERNEL_OK")
</pallas_src>

<mosaic_0001>
module attributes {stable_mosaic.version = 11 : i64} {
  func.func @_copy_kernel(%arg0: i32, %arg1: memref<1x2048xf32, #tpu.memory_space<vmem>>, %arg2: memref<1x2048xf32, #tpu.memory_space<vmem>>) attributes {dimension_semantics = [#tpu.dimension_semantics<parallel>], iteration_bounds = array<i64: 1>, scalar_prefetch = 0 : i64, scratch_operands = 0 : i64, tpu.core_type = #tpu.core_type<tc>, window_params = [{transform_indices = @transform_0, window_bounds = array<i64: 1, 2048>}, {transform_indices = @transform_1, window_bounds = array<i64: 1, 2048>}]} {
    %c0 = arith.constant 0 : index
    %c0_0 = arith.constant 0 : index
    %0 = vector.load %arg1[%c0, %c0_0] : memref<1x2048xf32, #tpu.memory_space<vmem>>, vector<1x2048xf32>
    %c0_1 = arith.constant 0 : index
    %c0_2 = arith.constant 0 : index
    %1 = vector.load %arg2[%c0_1, %c0_2] : memref<1x2048xf32, #tpu.memory_space<vmem>>, vector<1x2048xf32>
    tpu.vector_store %arg2[%c0_1, %c0_2], %0 {strides = array<i32>} : memref<1x2048xf32, #tpu.memory_space<vmem>>, vector<1x2048xf32>,
    return
  }
  func.func @transform_0(%arg0: i32) -> (i32, i32) {
    %c0_i32 = arith.constant 0 : i32
    %c0_i32_0 = arith.constant 0 : i32
    return %arg0, %c0_i32 : i32, i32
  }
  func.func @transform_1(%arg0: i32) -> (i32, i32) {
    %c0_i32 = arith.constant 0 : i32
    %c0_i32_0 = arith.constant 0 : i32
    return %arg0, %c0_i32 : i32, i32
  }
}

</mosaic_0001>

<llo_original>
// kernel: tpu_custom_call.1
$region0: #{tpu_custom_call.1}
  #allocation0 [shape = 'u32[]', space=smem, size = 0x4, offset = 0x4, fixed_abs, tag = 'smem constant byte address 0x4 - core index']
  #allocation1 [shape = 'u32[144,128]{1,0:T(1,128)}', space=vmem, size = 0x12000, scoped, tag = 'internal scratch']
  %s0 = inlined_call_operand.hbm [shape: f32[1,2048], index: 0, kind: input, shape index: {}]
  %s1 = inlined_call_operand.hbm [shape: f32[1,2048], index: 1, kind: output, shape index: {}]
  %s2 = sld [smem:[#allocation0]]
  $region18: #{tpu_custom_call.1} parent=0
    _
  %s4 = ssub.s32 1, %s2
  %s5 = scalar_select 0, %s4, %s2
  $region1: #{tpu_custom_call.1} parent=0
    #allocation2 [shape = 'u8[8192]{0}', space=vmem, size = 0x2000, scoped, tag = 'input window, operand 0, single buffered']
    #allocation3 [shape = 's32[1]{0}', space=sflag, size = 0x4, scoped, tag = 'scoped memory for tpu_custom_call.1']
    #allocation4 [shape = 's32[1]{0}', space=sflag, size = 0x4, scoped, tag = 'scoped memory for tpu_custom_call.1']
    #allocation5 [shape = 'u8[8192]{0}', space=vmem, size = 0x2000, scoped, tag = 'output window, operand 0, single buffered']
    %6 = vsyncpa [#allocation3], 0
    %7 = vsyncpa [#allocation4], 0
    // Predicated region
    $region2: #{tpu_custom_call.1} parent=1 // pred_check
      _
    $region3: #{tpu_custom_call.1} parent=1 // pred_check_branch
      %9 = sbr.rel (0) target = $region5
    $region4: #{tpu_custom_call.1} parent=1 // pred_region
      %s11 = ssub.s32 256, 256
      %12 = vsyncadd [#allocation3], %s11
      %s14 = sshll.u32 [#allocation2], 4
      %s15 = int_to_ptr.vmem [resolvable:$true] %s14
      %17 = dma.hbm_to_vmem [thread:$0]  %s0, 256, %s15, [#allocation3]
    $region5: #{tpu_custom_call.1} parent=1 // pred_fallthru
      _
    // Predicated region
    $region6: #{tpu_custom_call.1} parent=1 // pred_check
      _
    $region7: #{tpu_custom_call.1} parent=1 // pred_check_branch
      %19 = sbr.rel (0) target = $region9
    $region8: #{tpu_custom_call.1} parent=1 // pred_region
      %20 = dma.done [#allocation3], 256
    $region9: #{tpu_custom_call.1} parent=1 // pred_fallthru
      _
    %v21 = vld [vmem:[#allocation2] sm:$0xff]
    %v22 = vld [vmem:[#allocation2 + $0x8] sm:$0xff]
    %23 = vst [vmem:[#allocation5] sm:$0xff] %v21
    %24 = vst [vmem:[#allocation5 + $0x8] sm:$0xff] %v22
    // Predicated region
    $region10: #{tpu_custom_call.1} parent=1 // pred_check
      _
    $region11: #{tpu_custom_call.1} parent=1 // pred_check_branch
      %26 = sbr.rel (0) target = $region13
    $region12: #{tpu_custom_call.1} parent=1 // pred_region
      %s28 = ssub.s32 256, 256
      %29 = vsyncadd [#allocation4], %s28
      %s31 = sshll.u32 [#allocation5], 4
      %s32 = int_to_ptr.vmem [resolvable:$true] %s31
      %34 = dma.vmem_to_hbm [thread:$0]  %s32, 256, %s1, [#allocation4]
    $region13: #{tpu_custom_call.1} parent=1 // pred_fallthru
      _
    // Predicated region
    $region14: #{tpu_custom_call.1} parent=1 // pred_check
      _
    $region15: #{tpu_custom_call.1} parent=1 // pred_check_branch
      %36 = sbr.rel (0) target = $region17
    $region16: #{tpu_custom_call.1} parent=1 // pred_region
      %37 = dma.done [#allocation4], 256
    $region17: #{tpu_custom_call.1} parent=1 // pred_fallthru
      _
    %38 = vsyncpa [#allocation3], 1
    %39 = vsyncpa [#allocation4], 1

</llo_original>
